<compile_context>
chip_gen: v5e
topology: v5e:2x2
jax: 0.10.0
libtpu: 0.0.40
codegen_flags: <defaults>
</compile_context>

<pallas_src>
import functools

import jax
import jax.numpy as jnp
from jax.experimental import pallas as pl
from jax.experimental.pallas import tpu as pltpu


def basic_block_kernel(x_ref, scale_ref, shift_ref, w_ref, b_ref, out_ref, *, c_in):
    # x_ref:     (1, C_in, T)
    # scale_ref: (C_in, 1)    -- gamma / sqrt(running_var + eps)
    # shift_ref: (C_in, 1)    -- beta - running_mean * scale
    # w_ref:     (C_out, C_in)
    # b_ref:     (C_out, 1)
    # out_ref:   (1, C_in + C_out, T)
    x = x_ref[0]                                                  # (C_in, T)

    # Passthrough store first so it can overlap with the matmul below.
    out_ref[0, :c_in, :] = x

    # BatchNorm (folded affine) + ReLU, elementwise on the VPU.
    a = jnp.maximum(x * scale_ref[...] + shift_ref[...], 0.0)     # (C_in, T)

    # 1x1 conv == channel-mixing matmul on the MXU, bias folded into the epilogue.
    y = jnp.dot(w_ref[...], a, preferred_element_type=jnp.float32) + b_ref[...]

    # New channels written directly below the passthrough slab (no concat temp).
    out_ref[0, c_in:, :] = y.astype(out_ref.dtype)


def _round_down_128(v):
    return (v // 128) * 128


def _round_up_128(v):
    return ((v + 127) // 128) * 128


def _vmem_limit_bytes():
    """Generation-aware scoped-VMEM request: ~half of physical VMEM, capped at 48 MiB.
    v5e/v6e have 128 MiB physical VMEM per TensorCore, v7x only 64 MiB."""
    try:
        info = pltpu.get_tpu_info()
        phys = int(getattr(info, "vmem_capacity_bytes", 0)) or 64 * 1024 * 1024
    except Exception:  # interpret mode / older jax: be conservative (v7x-safe)
        phys = 64 * 1024 * 1024
    return min(48 * 1024 * 1024, max(16 * 1024 * 1024, phys // 2 - 8 * 1024 * 1024))


def _choose_hw_tile(hw, c_in, c_tot, dtype_bytes, vmem_budget):
    """Largest lane-dense (multiple-of-128) spatial tile whose double-buffered in/out
    blocks plus kernel intermediates (a, y) fit in ~75% of the VMEM budget."""
    if hw <= 128:
        return hw  # full-extent lane dim is always legal for small spatial sizes
    # Bytes per lane: 2x input block + 2x output block (double-buffered) + a + y.
    per_lane = (2 * c_in + 3 * c_tot) * dtype_bytes
    cap_lanes = max(128, (int(vmem_budget * 0.75) // per_lane))
    return max(128, min(_round_down_128(cap_lanes), _round_down_128(hw)))


def basic_block(x_nchw, gamma, beta, running_mean, running_var, w, b, eps=1e-5):
    """x_nchw: (N, C_in, H, W) float32.  Returns (N, C_in + C_out, H, W)."""
    N, C_in, H, W = x_nchw.shape
    C_out = w.shape[0]
    C_tot = C_in + C_out
    HW = H * W

    # Glue: layout change + fold BN stats into scale/shift (pure parameter prep).
    x = x_nchw.reshape(N, C_in, HW)
    inv_std = 1.0 / jnp.sqrt(running_var + eps)
    scale = (gamma * inv_std).reshape(C_in, 1)
    shift = (beta - running_mean * gamma * inv_std).reshape(C_in, 1)
    w2 = w.reshape(C_out, C_in)          # (C_out, C_in, 1, 1) -> (C_out, C_in)
    b2 = b.reshape(C_out, 1)

    vmem_limit = _vmem_limit_bytes()
    T = _choose_hw_tile(HW, C_in, C_tot, x.dtype.itemsize, vmem_limit)
    n_hw_tiles = pl.cdiv(HW, T)

    # Megacore (v7x, 2 TCs): make sure there are at least 2 grid steps to shard.
    if N * n_hw_tiles < 2 and HW >= 256:
        T = _round_up_128(pl.cdiv(HW, 2))
        n_hw_tiles = pl.cdiv(HW, T)

    cost = pl.CostEstimate(
        flops=2 * N * C_out * C_in * HW,
        transcendentals=0,
        bytes_accessed=(2 * C_in + C_out) * HW * N * x.dtype.itemsize,
    )

    kernel = functools.partial(basic_block_kernel, c_in=C_in)

    out = pl.pallas_call(
        kernel,
        out_shape=jax.ShapeDtypeStruct((N, C_tot, HW), x.dtype),
        grid_spec=pltpu.PrefetchScalarGridSpec(
            num_scalar_prefetch=0,
            grid=(N, n_hw_tiles),
            in_specs=[
                pl.BlockSpec((1, C_in, T), lambda n, t: (n, 0, t)),
                pl.BlockSpec((C_in, 1), lambda n, t: (0, 0)),
                pl.BlockSpec((C_in, 1), lambda n, t: (0, 0)),
                pl.BlockSpec((C_out, C_in), lambda n, t: (0, 0)),
                pl.BlockSpec((C_out, 1), lambda n, t: (0, 0)),
            ],
            out_specs=pl.BlockSpec((1, C_tot, T), lambda n, t: (n, 0, t)),
        ),
        compiler_params=pltpu.CompilerParams(
            dimension_semantics=("parallel", "parallel"),
            vmem_limit_bytes=vmem_limit,
        ),
        cost_estimate=cost,
    )(x, scale, shift, w2, b2)

    return out.reshape(N, C_tot, H, W)


def reference(x, gamma, beta, running_mean, running_var, w, b, eps=1e-5):
    # Pure-JAX reference of the eval-mode forward pass (NCHW).
    xn = (x - running_mean[None, :, None, None]) / jnp.sqrt(
        running_var[None, :, None, None] + eps)
    xn = xn * gamma[None, :, None, None] + beta[None, :, None, None]
    a = jnp.maximum(xn, 0.0)
    y = jnp.einsum('oc,nchw->nohw', w.reshape(w.shape[0], w.shape[1]), a)
    y = y + b[None, :, None, None]
    return jnp.concatenate([x, y], axis=1)


if __name__ == "__main__":
    key = jax.random.PRNGKey(0)
    N, C_in, C_out, H, W = 2, 4, 8, 16, 16

    ks = jax.random.split(key, 7)
    x = jax.random.normal(ks[0], (N, C_in, H, W), dtype=jnp.float32)

    # Deterministic synthetic parameters (BatchNorm2d + Conv2d(1x1, bias=True)).
    gamma = 1.0 + 0.1 * jax.random.normal(ks[1], (C_in,), dtype=jnp.float32)
    beta = 0.1 * jax.random.normal(ks[2], (C_in,), dtype=jnp.float32)
    running_mean = 0.2 * jax.random.normal(ks[3], (C_in,), dtype=jnp.float32)
    running_var = 1.0 + 0.1 * jnp.abs(jax.random.normal(ks[4], (C_in,), dtype=jnp.float32))
    w = 0.5 * jax.random.normal(ks[5], (C_out, C_in, 1, 1), dtype=jnp.float32)
    b = 0.1 * jax.random.normal(ks[6], (C_out,), dtype=jnp.float32)

    out = basic_block(x, gamma, beta, running_mean, running_var, w, b)
    out = jax.block_until_ready(out)

    ref = reference(x, gamma, beta, running_mean, running_var, w, b)
    assert out.shape == (N, C_in + C_out, H, W), out.shape
    assert jnp.allclose(out, ref, atol=1e-5, rtol=1e-5), float(jnp.max(jnp.abs(out - ref)))

    print("KERNEL_OK")
</pallas_src>

<mosaic_0001>
module attributes {stable_mosaic.version = 11 : i64} {
  func.func @basic_block_kernel(%arg0: i32, %arg1: i32, %arg2: memref<1x4x256xf32, #tpu.memory_space<vmem>>, %arg3: memref<4x1xf32, #tpu.memory_space<vmem>>, %arg4: memref<4x1xf32, #tpu.memory_space<vmem>>, %arg5: memref<8x4xf32, #tpu.memory_space<vmem>>, %arg6: memref<8x1xf32, #tpu.memory_space<vmem>>, %arg7: memref<1x12x256xf32, #tpu.memory_space<vmem>>) attributes {dimension_semantics = [#tpu.dimension_semantics<parallel>, #tpu.dimension_semantics<parallel>], iteration_bounds = array<i64: 2, 1>, scalar_prefetch = 0 : i64, scratch_operands = 0 : i64, tpu.core_type = #tpu.core_type<tc>, window_params = [{transform_indices = @transform_0, window_bounds = array<i64: 1, 4, 256>}, {pipeline_mode = #tpu.pipeline_mode<synchronous>, transform_indices = @transform_1, window_bounds = array<i64: 4, 1>}, {pipeline_mode = #tpu.pipeline_mode<synchronous>, transform_indices = @transform_2, window_bounds = array<i64: 4, 1>}, {pipeline_mode = #tpu.pipeline_mode<synchronous>, transform_indices = @transform_3, window_bounds = array<i64: 8, 4>}, {pipeline_mode = #tpu.pipeline_mode<synchronous>, transform_indices = @transform_4, window_bounds = array<i64: 8, 1>}, {transform_indices = @transform_5, window_bounds = array<i64: 1, 12, 256>}]} {
    %c0 = arith.constant 0 : index
    %c0_0 = arith.constant 0 : index
    %c0_1 = arith.constant 0 : index
    %0 = vector.load %arg2[%c0, %c0_0, %c0_1] : memref<1x4x256xf32, #tpu.memory_space<vmem>>, vector<1x4x256xf32>
    %1 = vector.shape_cast %0 : vector<1x4x256xf32> to vector<4x256xf32>
    %c0_2 = arith.constant 0 : index
    %c0_3 = arith.constant 0 : index
    %c0_4 = arith.constant 0 : index
    %2 = vector.load %arg7[%c0_2, %c0_3, %c0_4] : memref<1x12x256xf32, #tpu.memory_space<vmem>>, vector<1x4x256xf32>
    %3 = vector.shape_cast %2 : vector<1x4x256xf32> to vector<4x256xf32>
    %4 = vector.shape_cast %1 : vector<4x256xf32> to vector<1x4x256xf32>
    tpu.vector_store %arg7[%c0_2, %c0_3, %c0_4], %4 {strides = array<i32>} : memref<1x12x256xf32, #tpu.memory_space<vmem>>, vector<1x4x256xf32>,
    %c0_5 = arith.constant 0 : index
    %c0_6 = arith.constant 0 : index
    %5 = vector.load %arg3[%c0_5, %c0_6] : memref<4x1xf32, #tpu.memory_space<vmem>>, vector<4x1xf32>
    %6 = vector.broadcast %5 : vector<4x1xf32> to vector<4x256xf32>
    %7 = arith.mulf %1, %6 : vector<4x256xf32>
    %c0_7 = arith.constant 0 : index
    %c0_8 = arith.constant 0 : index
    %8 = vector.load %arg4[%c0_7, %c0_8] : memref<4x1xf32, #tpu.memory_space<vmem>>, vector<4x1xf32>
    %9 = vector.broadcast %8 : vector<4x1xf32> to vector<4x256xf32>
    %10 = arith.addf %7, %9 : vector<4x256xf32>
    %cst = arith.constant 0.000000e+00 : f32
    %11 = vector.broadcast %cst : f32 to vector<4x256xf32>
    %12 = arith.maximumf %10, %11 : vector<4x256xf32>
    %c0_9 = arith.constant 0 : index
    %c0_10 = arith.constant 0 : index
    %13 = vector.load %arg5[%c0_9, %c0_10] : memref<8x4xf32, #tpu.memory_space<vmem>>, vector<8x4xf32>
    %cst_11 = arith.constant dense<0.000000e+00> : vector<8x256xf32>
    %14 = tpu.matmul %13, %12, %cst_11 {dimension_numbers = #tpu.dot_dimension_numbers<[1], [0], [0], [1], [0, 0, 1, 1], [], []>} : vector<8x4xf32>, vector<4x256xf32>, vector<8x256xf32> -> vector<8x256xf32>
    %c0_12 = arith.constant 0 : index
    %c0_13 = arith.constant 0 : index
    %15 = vector.load %arg6[%c0_12, %c0_13] : memref<8x1xf32, #tpu.memory_space<vmem>>, vector<8x1xf32>
    %16 = vector.broadcast %15 : vector<8x1xf32> to vector<8x256xf32>
    %17 = arith.addf %14, %16 : vector<8x256xf32>
    %c0_14 = arith.constant 0 : index
    %c4 = arith.constant 4 : index
    %c0_15 = arith.constant 0 : index
    %18 = vector.load %arg7[%c0_14, %c4, %c0_15] : memref<1x12x256xf32, #tpu.memory_space<vmem>>, vector<1x8x256xf32>
    %19 = vector.shape_cast %18 : vector<1x8x256xf32> to vector<8x256xf32>
    %20 = vector.shape_cast %17 : vector<8x256xf32> to vector<1x8x256xf32>
    tpu.vector_store %arg7[%c0_14, %c4, %c0_15], %20 {strides = array<i32>} : memref<1x12x256xf32, #tpu.memory_space<vmem>>, vector<1x8x256xf32>,
    return
  }
  func.func @transform_0(%arg0: i32, %arg1: i32) -> (i32, i32, i32) {
    %c0_i32 = arith.constant 0 : i32
    %c0_i32_0 = arith.constant 0 : i32
    return %arg0, %c0_i32, %arg1 : i32, i32, i32
  }
  func.func @transform_1(%arg0: i32, %arg1: i32) -> (i32, i32) {
    %c0_i32 = arith.constant 0 : i32
    %c0_i32_0 = arith.constant 0 : i32
    %c0_i32_1 = arith.constant 0 : i32
    return %c0_i32, %c0_i32_0 : i32, i32
  }
  func.func @transform_2(%arg0: i32, %arg1: i32) -> (i32, i32) {
    %c0_i32 = arith.constant 0 : i32
    %c0_i32_0 = arith.constant 0 : i32
    %c0_i32_1 = arith.constant 0 : i32
    return %c0_i32, %c0_i32_0 : i32, i32
  }
  func.func @transform_3(%arg0: i32, %arg1: i32) -> (i32, i32) {
    %c0_i32 = arith.constant 0 : i32
    %c0_i32_0 = arith.constant 0 : i32
    %c0_i32_1 = arith.constant 0 : i32
    return %c0_i32, %c0_i32_0 : i32, i32
  }
  func.func @transform_4(%arg0: i32, %arg1: i32) -> (i32, i32) {
    %c0_i32 = arith.constant 0 : i32
    %c0_i32_0 = arith.constant 0 : i32
    %c0_i32_1 = arith.constant 0 : i32
    return %c0_i32, %c0_i32_0 : i32, i32
  }
  func.func @transform_5(%arg0: i32, %arg1: i32) -> (i32, i32, i32) {
    %c0_i32 = arith.constant 0 : i32
    %c0_i32_0 = arith.constant 0 : i32
    return %arg0, %c0_i32, %arg1 : i32, i32, i32
  }
}

</mosaic_0001>

<llo_original>
// kernel: tpu_custom_call.1
$region0: #{tpu_custom_call.1}
  #allocation0 [shape = 'u32[]', space=smem, size = 0x4, offset = 0x4, fixed_abs, tag = 'smem constant byte address 0x4 - core index']
  #allocation1 [shape = 'u32[72,128]{1,0:T(1,128)}', space=vmem, size = 0x9000, scoped, tag = 'internal scratch']
  %s0 = inlined_call_operand.vmem [shape: f32[2,4,256], index: 0, kind: input, shape index: {}]
  %s1 = inlined_call_operand.vmem [shape: f32[4,1], index: 1, kind: input, shape index: {}]
  %s2 = inlined_call_operand.vmem [shape: f32[4,1], index: 2, kind: input, shape index: {}]
  %s3 = inlined_call_operand.vmem [shape: f32[8,4], index: 3, kind: input, shape index: {}]
  %s4 = inlined_call_operand.vmem [shape: f32[8,1], index: 4, kind: input, shape index: {}]
  %s5 = inlined_call_operand.vmem [shape: f32[2,12,256], index: 5, kind: output, shape index: {}]
  %s6 = sld [smem:[#allocation0]]
  $region53: #{tpu_custom_call.1} parent=0
    _
  %s8 = ssub.s32 1, %s6
  %s9 = scalar_select 0, %s8, %s6
  loop: start=0, step=1, limit=4
  $region2: #{tpu_custom_call.1} parent=0 // loop_pre_header
    _
  $region3: #{tpu_custom_call.1} parent=0 // loop_header
    %s11 = sphi 0, %s15
    %p12 = scmp.ge.s32.totalorder %s11, 4
    %s18 = sphi 0, %s30
    %s19 = sphi 0, %s26
    %s20 = sphi 0, %s18
    %s21 = sphi 0, %s19
    %s22 = sphi 0, %s20
    %s23 = sphi 0, %s21
    %s35 = sphi 0, %s37
    %s38 = sphi 0, %s35
    %s39 = sphi 0, %s38
    %s55 = sphi 0, %s39
    %s59 = sphi 0, %s59
    %s61 = sphi 0, %s59
    %s62 = sphi 0, %s61
    %s76 = sphi 0, %s62
    %s80 = sphi 0, %s80
    %s82 = sphi 0, %s80
    %s83 = sphi 0, %s82
    %s97 = sphi 0, %s83
    %s101 = sphi 0, %s101
    %s103 = sphi 0, %s101
    %s104 = sphi 0, %s103
    %s118 = sphi 0, %s104
    %s122 = sphi 0, %s122
    %s124 = sphi 0, %s122
    %s125 = sphi 0, %s124
    %s139 = sphi 0, %s125
    %s147 = sphi 0, %s149
    %s150 = sphi 0, %s147
    %s151 = sphi 0, %s150
    %s167 = sphi 0, %s151
  $region4: #{tpu_custom_call.1} parent=0 // loop_header_branch
    %14 = sbr.rel (%p12) target = $region8
  $region5: #{tpu_custom_call.1} parent=0 // loop_body
    %s16 = ssub.s32 %s11, 1
    %s17 = ssub.s32 %s11, 2
    %s24 = sadd.s32 1, %s19
    %p25 = scmp.ge.s32.totalorder %s24, 1
    %s26 = scalar_select %p25, 0, %s24
    %s27 = sadd.s32 1, %s18
    %s28 = scalar_select %p25, %s27, %s18
    %p29 = scmp.ge.s32.totalorder %s28, 2
    %s30 = scalar_select %p29, 0, %s28
    %s31 = ssub.s32 %s18, %s30
    %s32 = ssub.s32 %s19, %s26
    %s33 = sor.u32 %s31, %s32
    %p34 = scmp.eq.s32.totalorder %s33, 0
    %s36 = sadd.s32 %s35, 1
    %s37 = scalar_select %p34, %s35, %s36
    %p40 = pneg %p34
    %p41 = scmp.eq.s32.totalorder %s11, 1
    %p42 = por %p40, %p41
    %p43 = scmp.ne.s32.totalorder %s35, %s38
    %p44 = scmp.eq.s32.totalorder %s11, 0
    %p45 = por %p43, %p44
    %p46 = scmp.ne.s32.totalorder %s35, %s38
    %p47 = scmp.eq.s32.totalorder %s16, 1
    %p48 = por %p46, %p47
    %p49 = scmp.ne.s32.totalorder %s38, %s39
    %p50 = scmp.eq.s32.totalorder %s16, 0
    %p51 = por %p49, %p50
    %p52 = scmp.ne.s32.totalorder %s38, %s39
    %p53 = scmp.eq.s32.totalorder %s17, 1
    %p54 = por %p52, %p53
    %p56 = scmp.ne.s32.totalorder %s39, %s55
    %p57 = scmp.eq.s32.totalorder %s17, 0
    %p58 = por %p56, %p57
    %s60 = sadd.s32 %s59, 1
    %p63 = scmp.eq.s32.totalorder %s11, 1
    %p64 = scmp.ne.s32.totalorder %s59, %s61
    %p65 = scmp.eq.s32.totalorder %s11, 0
    %p66 = por %p64, %p65
    %p67 = scmp.ne.s32.totalorder %s59, %s61
    %p68 = scmp.eq.s32.totalorder %s16, 1
    %p69 = por %p67, %p68
    %p70 = scmp.ne.s32.totalorder %s61, %s62
    %p71 = scmp.eq.s32.totalorder %s16, 0
    %p72 = por %p70, %p71
    %p73 = scmp.ne.s32.totalorder %s61, %s62
    %p74 = scmp.eq.s32.totalorder %s17, 1
    %p75 = por %p73, %p74
    %p77 = scmp.ne.s32.totalorder %s62, %s76
    %p78 = scmp.eq.s32.totalorder %s17, 0
    %p79 = por %p77, %p78
    %s81 = sadd.s32 %s80, 1
    %p84 = scmp.eq.s32.totalorder %s11, 1
    %p85 = scmp.ne.s32.totalorder %s80, %s82
    %p86 = scmp.eq.s32.totalorder %s11, 0
    %p87 = por %p85, %p86
    %p88 = scmp.ne.s32.totalorder %s80, %s82
    %p89 = scmp.eq.s32.totalorder %s16, 1
    %p90 = por %p88, %p89
    %p91 = scmp.ne.s32.totalorder %s82, %s83
    %p92 = scmp.eq.s32.totalorder %s16, 0
    %p93 = por %p91, %p92
    %p94 = scmp.ne.s32.totalorder %s82, %s83
    %p95 = scmp.eq.s32.totalorder %s17, 1
    %p96 = por %p94, %p95
    %p98 = scmp.ne.s32.totalorder %s83, %s97
    %p99 = scmp.eq.s32.totalorder %s17, 0
    %p100 = por %p98, %p99
    %s102 = sadd.s32 %s101, 1
    %p105 = scmp.eq.s32.totalorder %s11, 1
    %p106 = scmp.ne.s32.totalorder %s101, %s103
    %p107 = scmp.eq.s32.totalorder %s11, 0
    %p108 = por %p106, %p107
    %p109 = scmp.ne.s32.totalorder %s101, %s103
    %p110 = scmp.eq.s32.totalorder %s16, 1
    %p111 = por %p109, %p110
    %p112 = scmp.ne.s32.totalorder %s103, %s104
    %p113 = scmp.eq.s32.totalorder %s16, 0
    %p114 = por %p112, %p113
    %p115 = scmp.ne.s32.totalorder %s103, %s104
    %p116 = scmp.eq.s32.totalorder %s17, 1
    %p117 = por %p115, %p116
    %p119 = scmp.ne.s32.totalorder %s104, %s118
    %p120 = scmp.eq.s32.totalorder %s17, 0
    %p121 = por %p119, %p120
    %s123 = sadd.s32 %s122, 1
    %p126 = scmp.eq.s32.totalorder %s11, 1
    %p127 = scmp.ne.s32.totalorder %s122, %s124
    %p128 = scmp.eq.s32.totalorder %s11, 0
    %p129 = por %p127, %p128
    %p130 = scmp.ne.s32.totalorder %s122, %s124
    %p131 = scmp.eq.s32.totalorder %s16, 1
    %p132 = por %p130, %p131
    %p133 = scmp.ne.s32.totalorder %s124, %s125
    %p134 = scmp.eq.s32.totalorder %s16, 0
    %p135 = por %p133, %p134
    %p136 = scmp.ne.s32.totalorder %s124, %s125
    %p137 = scmp.eq.s32.totalorder %s17, 1
    %p138 = por %p136, %p137
    %p140 = scmp.ne.s32.totalorder %s125, %s139
    %p141 = scmp.eq.s32.totalorder %s17, 0
    %p142 = por %p140, %p141
    %s143 = ssub.s32 %s18, %s30
    %s144 = ssub.s32 %s19, %s26
    %s145 = sor.u32 %s143, %s144
    %p146 = scmp.eq.s32.totalorder %s145, 0
    %s148 = sadd.s32 %s147, 1
    %s149 = scalar_select %p146, %s147, %s148
    %p152 = pneg %p146
    %p153 = scmp.eq.s32.totalorder %s11, 1
    %p154 = por %p152, %p153
    %p155 = scmp.ne.s32.totalorder %s147, %s150
    %p156 = scmp.eq.s32.totalorder %s11, 0
    %p157 = por %p155, %p156
    %p158 = scmp.ne.s32.totalorder %s147, %s150
    %p159 = scmp.eq.s32.totalorder %s16, 1
    %p160 = por %p158, %p159
    %p161 = scmp.ne.s32.totalorder %s150, %s151
    %p162 = scmp.eq.s32.totalorder %s16, 0
    %p163 = por %p161, %p162
    %p164 = scmp.ne.s32.totalorder %s150, %s151
    %p165 = scmp.eq.s32.totalorder %s17, 1
    %p166 = por %p164, %p165
    %p168 = scmp.ne.s32.totalorder %s151, %s167
    %p169 = scmp.eq.s32.totalorder %s17, 0
    %p170 = por %p168, %p169
    %p171 = scmp.le.s32.totalorder 1, %s11
    %p172 = scmp.lt.s32.totalorder %s11, 3
    %p173 = pnand %p171, %p172
    %p174 = pneg %p173
    // Predicated region
    $region9: #{tpu_custom_call.1} parent=5 // pred_check
      _
    $region10: #{tpu_custom_call.1} parent=5 // pred_check_branch
      %176 = sbr.rel (%p173) target = $region12
    $region11: #{tpu_custom_call.1} parent=5 // pred_region
      %s177 = ssub.s32 %s11, 1
      // Predicated region
      $region13: #{tpu_custom_call.1} parent=11 // pred_check
        %p178 = pneg %p72
      $region14: #{tpu_custom_call.1} parent=11 // pred_check_branch
        %180 = sbr.rel (%p178) target = $region16
      $region15: #{tpu_custom_call.1} parent=11 // pred_region
        _
      $region16: #{tpu_custom_call.1} parent=11 // pred_fallthru
        _
      // Predicated region
      $region17: #{tpu_custom_call.1} parent=11 // pred_check
        %p181 = pneg %p93
      $region18: #{tpu_custom_call.1} parent=11 // pred_check_branch
        %183 = sbr.rel (%p181) target = $region20
      $region19: #{tpu_custom_call.1} parent=11 // pred_region
        _
      $region20: #{tpu_custom_call.1} parent=11 // pred_fallthru
        _
      // Predicated region
      $region21: #{tpu_custom_call.1} parent=11 // pred_check
        %p184 = pneg %p114
      $region22: #{tpu_custom_call.1} parent=11 // pred_check_branch
        %186 = sbr.rel (%p184) target = $region24
      $region23: #{tpu_custom_call.1} parent=11 // pred_region
        _
      $region24: #{tpu_custom_call.1} parent=11 // pred_fallthru
        _
      // Predicated region
      $region25: #{tpu_custom_call.1} parent=11 // pred_check
        %p187 = pneg %p135
      $region26: #{tpu_custom_call.1} parent=11 // pred_check_branch
        %189 = sbr.rel (%p187) target = $region28
      $region27: #{tpu_custom_call.1} parent=11 // pred_region
        _
      $region28: #{tpu_custom_call.1} parent=11 // pred_fallthru
        _
    $region12: #{tpu_custom_call.1} parent=5 // pred_fallthru
      _
    %p190 = scmp.lt.s32.totalorder %s11, 2
    // Predicated region
    $region29: #{tpu_custom_call.1} parent=5 // pred_check
      %p191 = pneg %p190
    $region30: #{tpu_custom_call.1} parent=5 // pred_check_branch
      %193 = sbr.rel (%p191) target = $region32
    $region31: #{tpu_custom_call.1} parent=5 // pred_region
      // Predicated region
      $region33: #{tpu_custom_call.1} parent=31 // pred_check
        %p194 = pneg %p45
      $region34: #{tpu_custom_call.1} parent=31 // pred_check_branch
        %196 = sbr.rel (%p194) target = $region36
      $region35: #{tpu_custom_call.1} parent=31 // pred_region
        %s197 = smul.u32 2, %s19
        %p198 = scmp.lt.s32.totalorder %s18, 1
        %s199 = scalar_select %p198, %s18, 1
        %p200 = scmp.lt.s32.totalorder %s197, 1
        %s201 = scalar_select %p200, %s197, 1
        %s202 = smul.addr %s199, 2
        %s203 = sadd.s32 %s201, %s202
        %s204 = smul.addr %s203, 4
        %s205 = scalar_lea.vmem %s0, %s204
        %s206 = smul.u32 2, %s19
      $region36: #{tpu_custom_call.1} parent=31 // pred_fallthru
        _
    $region32: #{tpu_custom_call.1} parent=5 // pred_fallthru
      _
    %p207 = scmp.le.s32.totalorder 1, %s11
    %p208 = scmp.lt.s32.totalorder %s11, 3
    %p209 = pnand %p207, %p208
    %p210 = pneg %p209
    // Predicated region
    $region37: #{tpu_custom_call.1} parent=5 // pred_check
      _
    $region38: #{tpu_custom_call.1} parent=5 // pred_check_branch
      %212 = sbr.rel (%p209) target = $region40
    $region39: #{tpu_custom_call.1} parent=5 // pred_region
      %s213 = ssub.s32 %s11, 1
      %s214 = smul.u32 2, %s21
      %p215 = scmp.lt.s32.totalorder %s20, 1
      %s216 = scalar_select %p215, %s20, 1
      %p217 = scmp.lt.s32.totalorder %s214, 1
      %s218 = scalar_select %p217, %s214, 1
      %s219 = smul.addr %s216, 2
      %s220 = sadd.s32 %s218, %s219
      %s221 = smul.addr %s220, 4
      %s222 = scalar_lea.vmem %s0, %s221
      %p223 = pneg %p51
      %p224 = pneg %p48
      %p225 = pneg %p72
      %p226 = pneg %p69
      %p227 = pneg %p93
      %p228 = pneg %p90
      %p229 = pneg %p114
      %p230 = pneg %p111
      %p231 = pneg %p135
      %p232 = pneg %p132
      %p233 = pneg %p163
      %p234 = pneg %p160
      %s235 = smul.u32 2, %s21
      %p236 = scmp.lt.s32.totalorder %s20, 1
      %s237 = scalar_select %p236, %s20, 1
      %p238 = scmp.lt.s32.totalorder %s235, 1
      %s239 = scalar_select %p238, %s235, 1
      %s240 = smul.addr %s237, 4
      %s241 = sadd.s32 %s239, %s240
      %s242 = smul.addr %s241, 8
      %s243 = scalar_lea.vmem %s5, %s242
      %s244 = smul.u32 2, %s21
      %p245 = scmp.lt.s32.totalorder %s20, 1
      %s246 = scalar_select %p245, %s20, 1
      %p247 = scmp.lt.s32.totalorder %s244, 1
      %s248 = scalar_select %p247, %s244, 1
      %s249 = smul.addr %s246, 2
      %s250 = sadd.s32 %s248, %s249
      %s251 = smul.addr %s250, 4
      %s252 = scalar_lea.vmem %s0, %s251
      %s253 = smul.u32 2, %s21
      %s254 = smul.u32 2, %s21
      %p255 = scmp.lt.s32.totalorder %s20, 1
      %s256 = scalar_select %p255, %s20, 1
      %p257 = scmp.lt.s32.totalorder %s254, 1
      %s258 = scalar_select %p257, %s254, 1
      %s259 = smul.addr %s256, 4
      %s260 = sadd.s32 %s258, %s259
      %s261 = smul.addr %s260, 8
      %s262 = scalar_lea.vmem %s5, %s261
      %s263 = smul.u32 2, %s21
      %v264 = vld [vmem:[%s252] sm:$0xff]
      %266 = vst [vmem:[#allocation1] ss:$2 sm:$0xff] %v264
      %v267 = vld.sshfl [vmem:[#allocation1] sm:$0xff pattern:$0x75316420]
      %v268 = vld.sshfl [vmem:[#allocation1 + $0x8] sm:$0xff pattern:$0x75316420]
      %271 = vst [vmem:[%s262] sm:$0xf] %v267
      %272 = vst [vmem:[%s262 + $0x8] sm:$0xf] %v268
      %v273 = vld [vmem:[%s1] sm:$0xf]
      %275 = vset.pattern.permute.xlu0 0
      %276 = vperm.xlu0 %275, %v273
      %v277 = vpop.permute.xlu0 %276
      %v279 = vunpack.c.l.s4 839922192
      %v280 = vunpack.c.0.s8 %v279
      %v281 = vperm.slane %v277, %v280
      %v283 = vmul.f32 %v264, %v281
      %v284 = vld [vmem:[%s2] sm:$0xf]
      %286 = vset.pattern.permute.xlu0 0
      %287 = vperm.xlu0 %286, %v284
      %v288 = vpop.permute.xlu0 %287
      %v290 = vunpack.c.l.s4 839922192
      %v291 = vunpack.c.0.s8 %v290
      %v292 = vperm.slane %v288, %v291
      %v294 = vadd.f32 %v283, %v292
      %v295 = vmax.f32 %v294, 0.0
      %v296 = vld [vmem:[%s3] sm:$0xff]
      %v297 = vld [vmem:[%s4] sm:$0xff]
      %299 = vset.pattern.permute.xlu0 0
      %300 = vperm.xlu0 %299, %v297
      %v301 = vpop.permute.xlu0 %300
      %304 = vst [vmem:[#allocation1] ss:$2 sm:$0xff] %v295
      %v305 = vld.sshfl [vmem:[#allocation1] sm:$0xff pattern:$0x75316420]
      %v306 = vld.sshfl [vmem:[#allocation1 + $0x8] sm:$0xff pattern:$0x75316420]
      %vm307 = vcmask 31744
      %v309 = vsel %vm307, %v296, 0
      %vm311 = vcmask 1043456
      %v312 = vsel %vm311, %v305, 0
      %v314 = vsel %vm311, %v306, 0
      %316 = vmatpush.msra.mxu0 0.0
      %317 = vmatpush.msra.mxu0 0.0
      %318 = vmatpush.msra.mxu0 0.0
      %319 = vmatpush.msra.mxu0 0.0
      %320 = vmatpush.msra.mxu0 0.0
      %321 = vmatpush.msra.mxu0 0.0
      %322 = vmatpush.msra.mxu0 0.0
      %323 = vmatpush.msra.mxu0 0.0
      %324 = vmatpush.msra.mxu0 0.0
      %325 = vmatpush.msra.mxu0 0.0
      %326 = vmatpush.msra.mxu0 0.0
      %327 = vmatpush.msra.mxu0 0.0
      %328 = vmatpush.msra.mxu0 0.0
      %329 = vmatpush.msra.mxu0 0.0
      %330 = vmatpush.msra.mxu0 0.0
      %331 = vmatpush.msra.mxu0 %v312
      %332 = vmatmul.f32.gmra.mxu0 %v309
      %v333 = vpop.f32.mrf.mxu0
      %v334 = vadd.f32 %v301, %v333
      %335 = vdwg.mxu0
      %336 = vmatpush.msra.mxu0 0.0
      %337 = vmatpush.msra.mxu0 0.0
      %338 = vmatpush.msra.mxu0 0.0
      %339 = vmatpush.msra.mxu0 0.0
      %340 = vmatpush.msra.mxu0 0.0
      %341 = vmatpush.msra.mxu0 0.0
      %342 = vmatpush.msra.mxu0 0.0
      %343 = vmatpush.msra.mxu0 0.0
      %344 = vmatpush.msra.mxu0 0.0
      %345 = vmatpush.msra.mxu0 0.0
      %346 = vmatpush.msra.mxu0 0.0
      %347 = vmatpush.msra.mxu0 0.0
      %348 = vmatpush.msra.mxu0 0.0
      %349 = vmatpush.msra.mxu0 0.0
      %350 = vmatpush.msra.mxu0 0.0
      %351 = vmatpush.msra.mxu0 %v314
      %352 = vmatmul.f32.gmra.mxu0 %v309
      %v353 = vpop.f32.mrf.mxu0
      %v354 = vadd.f32 %v301, %v353
      %355 = vdwg.mxu0
      %v358 = vrot.slane %v334, 4
      %v359 = vrot.slane %v354, 4
      %362 = vst [vmem:[%s262] sm:$0xf0] %v358
      %363 = vst [vmem:[%s262 + $0x8] sm:$0xf0] %v359
      %364 = vst [vmem:[%s262 + $0x10] sm:$0xf] %v358
      %365 = vst [vmem:[%s262 + $0x18] sm:$0xf] %v359
      %s366 = smul.u32 2, %s21
      %p367 = scmp.lt.s32.totalorder %s20, 1
      %s368 = scalar_select %p367, %s20, 1
      %p369 = scmp.lt.s32.totalorder %s366, 1
      %s370 = scalar_select %p369, %s366, 1
      %s371 = smul.addr %s368, 4
      %s372 = sadd.s32 %s370, %s371
      %s373 = smul.addr %s372, 8
      %s374 = scalar_lea.vmem %s5, %s373
      // Predicated region
      $region41: #{tpu_custom_call.1} parent=39 // pred_check
        %p375 = pneg %p160
      $region42: #{tpu_custom_call.1} parent=39 // pred_check_branch
        %377 = sbr.rel (%p375) target = $region44
      $region43: #{tpu_custom_call.1} parent=39 // pred_region
        %s378 = smul.u32 2, %s21
      $region44: #{tpu_custom_call.1} parent=39 // pred_fallthru
        _
    $region40: #{tpu_custom_call.1} parent=5 // pred_fallthru
      _
    %p379 = scmp.le.s32.totalorder 2, %s11
    // Predicated region
    $region45: #{tpu_custom_call.1} parent=5 // pred_check
      %p380 = pneg %p379
    $region46: #{tpu_custom_call.1} parent=5 // pred_check_branch
      %382 = sbr.rel (%p380) target = $region48
    $region47: #{tpu_custom_call.1} parent=5 // pred_region
      %s383 = ssub.s32 %s11, 2
      // Predicated region
      $region49: #{tpu_custom_call.1} parent=47 // pred_check
        %p384 = pneg %p166
      $region50: #{tpu_custom_call.1} parent=47 // pred_check_branch
        %386 = sbr.rel (%p384) target = $region52
      $region51: #{tpu_custom_call.1} parent=47 // pred_region
        %s387 = smul.u32 2, %s23
        %p388 = scmp.lt.s32.totalorder %s22, 1
        %s389 = scalar_select %p388, %s22, 1
        %p390 = scmp.lt.s32.totalorder %s387, 1
        %s391 = scalar_select %p390, %s387, 1
        %s392 = smul.addr %s389, 4
        %s393 = sadd.s32 %s391, %s392
        %s394 = smul.addr %s393, 8
        %s395 = scalar_lea.vmem %s5, %s394
      $region52: #{tpu_custom_call.1} parent=47 // pred_fallthru
        _
    $region48: #{tpu_custom_call.1} parent=5 // pred_fallthru
      _
  $region6: #{tpu_custom_call.1} parent=0 // loop_footer
    %s15 = sadd.s32 1, %s11
  $region7: #{tpu_custom_call.1} parent=0 // loop_footer_branch
    %10 = sbr.rel target = $region3
  $region8: #{tpu_custom_call.1} parent=0 // loop_exit
    _

</llo_original>
